<compile_context>
chip_gen: v6e
topology: v6e:2x2x1
jax: 0.10.0
libtpu: 0.0.40
codegen_flags: <defaults>
</compile_context>

<pallas_src>
import jax
import jax.numpy as jnp
from jax.experimental import pallas as pl
from jax.experimental.pallas import tpu as pltpu


def _attention_kernel(x_ref, w1_ref, b1_ref, w2_ref, b2_ref, o_ref):
    # x_ref:  (1, C, t_hw)  NCHW tile; spatial on lanes (lane-dense)
    # w1_ref: (Cmid, C)     conv1 weight, PyTorch layout (no transpose needed)
    # b1_ref: (Cmid, 1)
    # w2_ref: (C, Cmid)     conv2 weight, PyTorch layout
    # b2_ref: (C, 1)
    x = x_ref[0].astype(jnp.float32)                                   # (C, t_hw)
    h = jnp.dot(w1_ref[...], x, preferred_element_type=jnp.float32) + b1_ref[...]
    h = jnp.maximum(h, 0.0)                                            # ReLU
    g = jnp.dot(w2_ref[...], h, preferred_element_type=jnp.float32) + b2_ref[...]
    g = jax.nn.sigmoid(g)                                              # Sigmoid gate
    o_ref[0] = (g * x).astype(o_ref.dtype)                             # gate * input


def attention_forward(x_nchw, w1, b1, w2, b2, *, t_hw=None):
    """x_nchw: [N, C, H, W]; w1: [Cmid, C]; b1: [Cmid]; w2: [C, Cmid]; b2: [C]."""
    N, C, H, W = x_nchw.shape
    Cmid = w1.shape[0]
    HW = H * W

    if t_hw is None:
        # Largest lane-dense tile (multiple of 128) up to 2048 columns.
        # At f32 with C<=256 that is ~2 MiB for double-buffered in+out,
        # comfortably inside the default scoped VMEM on v5e/v6e/v7x.
        t_hw = min(pl.cdiv(HW, 128) * 128, 2048)
    t_hw = max(128, (t_hw // 128) * 128)

    # Pad spatial axis so the grid covers it exactly; padded columns are zero,
    # so their gated output is zero and gets sliced off below.
    HW_pad = pl.cdiv(HW, t_hw) * t_hw
    x_flat = x_nchw.reshape(N, C, HW)
    if HW_pad != HW:
        x_flat = jnp.pad(x_flat, ((0, 0), (0, 0), (0, HW_pad - HW)))

    b1_r = b1.reshape(Cmid, 1)
    b2_r = b2.reshape(C, 1)

    out_flat = pl.pallas_call(
        _attention_kernel,
        out_shape=jax.ShapeDtypeStruct((N, C, HW_pad), x_nchw.dtype),
        grid_spec=pltpu.PrefetchScalarGridSpec(
            num_scalar_prefetch=0,
            grid=(N, HW_pad // t_hw),
            in_specs=[
                pl.BlockSpec((1, C, t_hw), lambda n, j: (n, 0, j)),
                pl.BlockSpec((Cmid, C), lambda n, j: (0, 0)),
                pl.BlockSpec((Cmid, 1), lambda n, j: (0, 0)),
                pl.BlockSpec((C, Cmid), lambda n, j: (0, 0)),
                pl.BlockSpec((C, 1), lambda n, j: (0, 0)),
            ],
            out_specs=pl.BlockSpec((1, C, t_hw), lambda n, j: (n, 0, j)),
        ),
        compiler_params=pltpu.CompilerParams(
            dimension_semantics=("parallel", "parallel")),
    )(x_flat, w1, b1_r, w2, b2_r)

    return out_flat[:, :, :HW].reshape(N, C, H, W)


def _reference(x_nchw, w1, b1, w2, b2):
    # Pure-JAX reference of the PyTorch forward (1x1 convs on NCHW).
    h = jnp.einsum("nchw,mc->nmhw", x_nchw, w1) + b1[None, :, None, None]
    h = jnp.maximum(h, 0.0)
    g = jax.nn.sigmoid(
        jnp.einsum("nmhw,cm->nchw", h, w2) + b2[None, :, None, None])
    return g * x_nchw


if __name__ == "__main__":
    # Module defaults: reduction=16, n_feats=60 -> Cmid = 60 // 16 = 3.
    reduction = 16
    n_feats = 60
    c_mid = n_feats // reduction

    N, C, H, W = 2, n_feats, 16, 16          # input shape [2, 60, 16, 16]

    key = jax.random.PRNGKey(0)
    kx, k1, kb1, k2, kb2 = jax.random.split(key, 5)

    x = jax.random.normal(kx, (N, C, H, W), dtype=jnp.float32)
    # Conv2d(channel, channel//reduction, 1) weight: (Cmid, C, 1, 1) -> (Cmid, C)
    w1 = jax.random.normal(k1, (c_mid, C), dtype=jnp.float32) * 0.1
    b1 = jax.random.normal(kb1, (c_mid,), dtype=jnp.float32) * 0.1
    # Conv2d(channel//reduction, channel, 1) weight: (C, Cmid, 1, 1) -> (C, Cmid)
    w2 = jax.random.normal(k2, (C, c_mid), dtype=jnp.float32) * 0.1
    b2 = jax.random.normal(kb2, (C,), dtype=jnp.float32) * 0.1

    out = attention_forward(x, w1, b1, w2, b2)
    out = jax.block_until_ready(out)

    ref = _reference(x, w1, b1, w2, b2)
    assert out.shape == x.shape
    assert jnp.allclose(out, ref, atol=1e-5, rtol=1e-5)

    print("KERNEL_OK")
</pallas_src>

<mosaic_0001>
module attributes {stable_mosaic.version = 11 : i64} {
  func.func @_attention_kernel(%arg0: i32, %arg1: i32, %arg2: memref<1x60x256xf32, #tpu.memory_space<vmem>>, %arg3: memref<3x60xf32, #tpu.memory_space<vmem>>, %arg4: memref<3x1xf32, #tpu.memory_space<vmem>>, %arg5: memref<60x3xf32, #tpu.memory_space<vmem>>, %arg6: memref<60x1xf32, #tpu.memory_space<vmem>>, %arg7: memref<1x60x256xf32, #tpu.memory_space<vmem>>) attributes {dimension_semantics = [#tpu.dimension_semantics<parallel>, #tpu.dimension_semantics<parallel>], iteration_bounds = array<i64: 2, 1>, scalar_prefetch = 0 : i64, scratch_operands = 0 : i64, tpu.core_type = #tpu.core_type<tc>, window_params = [{transform_indices = @transform_0, window_bounds = array<i64: 1, 60, 256>}, {pipeline_mode = #tpu.pipeline_mode<synchronous>, transform_indices = @transform_1, window_bounds = array<i64: 3, 60>}, {pipeline_mode = #tpu.pipeline_mode<synchronous>, transform_indices = @transform_2, window_bounds = array<i64: 3, 1>}, {pipeline_mode = #tpu.pipeline_mode<synchronous>, transform_indices = @transform_3, window_bounds = array<i64: 60, 3>}, {pipeline_mode = #tpu.pipeline_mode<synchronous>, transform_indices = @transform_4, window_bounds = array<i64: 60, 1>}, {transform_indices = @transform_5, window_bounds = array<i64: 1, 60, 256>}]} {
    %c0 = arith.constant 0 : index
    %c0_0 = arith.constant 0 : index
    %c0_1 = arith.constant 0 : index
    %0 = vector.load %arg2[%c0, %c0_0, %c0_1] : memref<1x60x256xf32, #tpu.memory_space<vmem>>, vector<1x60x256xf32>
    %1 = vector.shape_cast %0 : vector<1x60x256xf32> to vector<60x256xf32>
    %c0_2 = arith.constant 0 : index
    %c0_3 = arith.constant 0 : index
    %2 = vector.load %arg3[%c0_2, %c0_3] : memref<3x60xf32, #tpu.memory_space<vmem>>, vector<3x60xf32>
    %cst = arith.constant dense<0.000000e+00> : vector<3x256xf32>
    %3 = tpu.matmul %2, %1, %cst {dimension_numbers = #tpu.dot_dimension_numbers<[1], [0], [0], [1], [0, 0, 1, 1], [], []>} : vector<3x60xf32>, vector<60x256xf32>, vector<3x256xf32> -> vector<3x256xf32>
    %c0_4 = arith.constant 0 : index
    %c0_5 = arith.constant 0 : index
    %4 = vector.load %arg4[%c0_4, %c0_5] : memref<3x1xf32, #tpu.memory_space<vmem>>, vector<3x1xf32>
    %5 = vector.broadcast %4 : vector<3x1xf32> to vector<3x256xf32>
    %6 = arith.addf %3, %5 : vector<3x256xf32>
    %cst_6 = arith.constant 0.000000e+00 : f32
    %7 = vector.broadcast %cst_6 : f32 to vector<3x256xf32>
    %8 = arith.maximumf %6, %7 : vector<3x256xf32>
    %c0_7 = arith.constant 0 : index
    %c0_8 = arith.constant 0 : index
    %9 = vector.load %arg5[%c0_7, %c0_8] : memref<60x3xf32, #tpu.memory_space<vmem>>, vector<60x3xf32>
    %cst_9 = arith.constant dense<0.000000e+00> : vector<60x256xf32>
    %10 = tpu.matmul %9, %8, %cst_9 {dimension_numbers = #tpu.dot_dimension_numbers<[1], [0], [0], [1], [0, 0, 1, 1], [], []>} : vector<60x3xf32>, vector<3x256xf32>, vector<60x256xf32> -> vector<60x256xf32>
    %c0_10 = arith.constant 0 : index
    %c0_11 = arith.constant 0 : index
    %11 = vector.load %arg6[%c0_10, %c0_11] : memref<60x1xf32, #tpu.memory_space<vmem>>, vector<60x1xf32>
    %12 = vector.broadcast %11 : vector<60x1xf32> to vector<60x256xf32>
    %13 = arith.addf %10, %12 : vector<60x256xf32>
    %14 = arith.negf %13 : vector<60x256xf32>
    %15 = math.exp %14 : vector<60x256xf32>
    %cst_12 = arith.constant 1.000000e+00 : f32
    %16 = vector.broadcast %cst_12 : f32 to vector<60x256xf32>
    %17 = arith.addf %16, %15 : vector<60x256xf32>
    %18 = arith.divf %16, %17 : vector<60x256xf32>
    %19 = arith.mulf %18, %1 : vector<60x256xf32>
    %c0_13 = arith.constant 0 : index
    %c0_14 = arith.constant 0 : index
    %c0_15 = arith.constant 0 : index
    %20 = vector.load %arg7[%c0_13, %c0_14, %c0_15] : memref<1x60x256xf32, #tpu.memory_space<vmem>>, vector<1x60x256xf32>
    %21 = vector.shape_cast %20 : vector<1x60x256xf32> to vector<60x256xf32>
    %22 = vector.shape_cast %19 : vector<60x256xf32> to vector<1x60x256xf32>
    tpu.vector_store %arg7[%c0_13, %c0_14, %c0_15], %22 {strides = array<i32>} : memref<1x60x256xf32, #tpu.memory_space<vmem>>, vector<1x60x256xf32>,
    return
  }
  func.func @transform_0(%arg0: i32, %arg1: i32) -> (i32, i32, i32) {
    %c0_i32 = arith.constant 0 : i32
    %c0_i32_0 = arith.constant 0 : i32
    return %arg0, %c0_i32, %arg1 : i32, i32, i32
  }
  func.func @transform_1(%arg0: i32, %arg1: i32) -> (i32, i32) {
    %c0_i32 = arith.constant 0 : i32
    %c0_i32_0 = arith.constant 0 : i32
    %c0_i32_1 = arith.constant 0 : i32
    return %c0_i32, %c0_i32_0 : i32, i32
  }
  func.func @transform_2(%arg0: i32, %arg1: i32) -> (i32, i32) {
    %c0_i32 = arith.constant 0 : i32
    %c0_i32_0 = arith.constant 0 : i32
    %c0_i32_1 = arith.constant 0 : i32
    return %c0_i32, %c0_i32_0 : i32, i32
  }
  func.func @transform_3(%arg0: i32, %arg1: i32) -> (i32, i32) {
    %c0_i32 = arith.constant 0 : i32
    %c0_i32_0 = arith.constant 0 : i32
    %c0_i32_1 = arith.constant 0 : i32
    return %c0_i32, %c0_i32_0 : i32, i32
  }
  func.func @transform_4(%arg0: i32, %arg1: i32) -> (i32, i32) {
    %c0_i32 = arith.constant 0 : i32
    %c0_i32_0 = arith.constant 0 : i32
    %c0_i32_1 = arith.constant 0 : i32
    return %c0_i32, %c0_i32_0 : i32, i32
  }
  func.func @transform_5(%arg0: i32, %arg1: i32) -> (i32, i32, i32) {
    %c0_i32 = arith.constant 0 : i32
    %c0_i32_0 = arith.constant 0 : i32
    return %arg0, %c0_i32, %arg1 : i32, i32, i32
  }
}

</mosaic_0001>

<llo_original>
// kernel: tpu_custom_call.1
$region0: #{tpu_custom_call.1}
  #allocation0 [shape = 'u32[]', space=smem, size = 0x4, offset = 0x4, fixed_abs, tag = 'smem constant byte address 0x4 - core index']
  #allocation1 [shape = 'u32[144,128]{1,0:T(1,128)}', space=vmem, size = 0x12000, scoped, tag = 'internal scratch']
  %s0 = inlined_call_operand.vmem [shape: f32[2,60,256], index: 0, kind: input, shape index: {}]
  %s1 = inlined_call_operand.vmem [shape: f32[3,60], index: 1, kind: input, shape index: {}]
  %s2 = inlined_call_operand.vmem [shape: f32[3,1], index: 2, kind: input, shape index: {}]
  %s3 = inlined_call_operand.vmem [shape: f32[60,3], index: 3, kind: input, shape index: {}]
  %s4 = inlined_call_operand.vmem [shape: f32[60,1], index: 4, kind: input, shape index: {}]
  %s5 = inlined_call_operand.vmem [shape: f32[2,60,256], index: 5, kind: output, shape index: {}]
  %s6 = sld [smem:[#allocation0]]
  $region53: #{tpu_custom_call.1} parent=0
    _
  %s8 = ssub.s32 1, %s6
  %s9 = scalar_select 0, %s8, %s6
  loop: start=0, step=1, limit=4
  $region2: #{tpu_custom_call.1} parent=0 // loop_pre_header
    _
  $region3: #{tpu_custom_call.1} parent=0 // loop_header
    %s11 = sphi 0, %s15
    %p12 = scmp.ge.s32.totalorder %s11, 4
    %s18 = sphi 0, %s30
    %s19 = sphi 0, %s26
    %s20 = sphi 0, %s18
    %s21 = sphi 0, %s19
    %s22 = sphi 0, %s20
    %s23 = sphi 0, %s21
    %s35 = sphi 0, %s37
    %s38 = sphi 0, %s35
    %s39 = sphi 0, %s38
    %s55 = sphi 0, %s39
    %s59 = sphi 0, %s59
    %s61 = sphi 0, %s59
    %s62 = sphi 0, %s61
    %s76 = sphi 0, %s62
    %s80 = sphi 0, %s80
    %s82 = sphi 0, %s80
    %s83 = sphi 0, %s82
    %s97 = sphi 0, %s83
    %s101 = sphi 0, %s101
    %s103 = sphi 0, %s101
    %s104 = sphi 0, %s103
    %s118 = sphi 0, %s104
    %s122 = sphi 0, %s122
    %s124 = sphi 0, %s122
    %s125 = sphi 0, %s124
    %s139 = sphi 0, %s125
    %s147 = sphi 0, %s149
    %s150 = sphi 0, %s147
    %s151 = sphi 0, %s150
    %s167 = sphi 0, %s151
  $region4: #{tpu_custom_call.1} parent=0 // loop_header_branch
    %14 = sbr.rel (%p12) target = $region8
  $region5: #{tpu_custom_call.1} parent=0 // loop_body
    %s16 = ssub.s32 %s11, 1
    %s17 = ssub.s32 %s11, 2
    %s24 = sadd.s32 1, %s19
    %p25 = scmp.ge.s32.totalorder %s24, 1
    %s26 = scalar_select %p25, 0, %s24
    %s27 = sadd.s32 1, %s18
    %s28 = scalar_select %p25, %s27, %s18
    %p29 = scmp.ge.s32.totalorder %s28, 2
    %s30 = scalar_select %p29, 0, %s28
    %s31 = ssub.s32 %s18, %s30
    %s32 = ssub.s32 %s19, %s26
    %s33 = sor.u32 %s31, %s32
    %p34 = scmp.eq.s32.totalorder %s33, 0
    %s36 = sadd.s32 %s35, 1
    %s37 = scalar_select %p34, %s35, %s36
    %p40 = pneg %p34
    %p41 = scmp.eq.s32.totalorder %s11, 1
    %p42 = por %p40, %p41
    %p43 = scmp.ne.s32.totalorder %s35, %s38
    %p44 = scmp.eq.s32.totalorder %s11, 0
    %p45 = por %p43, %p44
    %p46 = scmp.ne.s32.totalorder %s35, %s38
    %p47 = scmp.eq.s32.totalorder %s16, 1
    %p48 = por %p46, %p47
    %p49 = scmp.ne.s32.totalorder %s38, %s39
    %p50 = scmp.eq.s32.totalorder %s16, 0
    %p51 = por %p49, %p50
    %p52 = scmp.ne.s32.totalorder %s38, %s39
    %p53 = scmp.eq.s32.totalorder %s17, 1
    %p54 = por %p52, %p53
    %p56 = scmp.ne.s32.totalorder %s39, %s55
    %p57 = scmp.eq.s32.totalorder %s17, 0
    %p58 = por %p56, %p57
    %s60 = sadd.s32 %s59, 1
    %p63 = scmp.eq.s32.totalorder %s11, 1
    %p64 = scmp.ne.s32.totalorder %s59, %s61
    %p65 = scmp.eq.s32.totalorder %s11, 0
    %p66 = por %p64, %p65
    %p67 = scmp.ne.s32.totalorder %s59, %s61
    %p68 = scmp.eq.s32.totalorder %s16, 1
    %p69 = por %p67, %p68
    %p70 = scmp.ne.s32.totalorder %s61, %s62
    %p71 = scmp.eq.s32.totalorder %s16, 0
    %p72 = por %p70, %p71
    %p73 = scmp.ne.s32.totalorder %s61, %s62
    %p74 = scmp.eq.s32.totalorder %s17, 1
    %p75 = por %p73, %p74
    %p77 = scmp.ne.s32.totalorder %s62, %s76
    %p78 = scmp.eq.s32.totalorder %s17, 0
    %p79 = por %p77, %p78
    %s81 = sadd.s32 %s80, 1
    %p84 = scmp.eq.s32.totalorder %s11, 1
    %p85 = scmp.ne.s32.totalorder %s80, %s82
    %p86 = scmp.eq.s32.totalorder %s11, 0
    %p87 = por %p85, %p86
    %p88 = scmp.ne.s32.totalorder %s80, %s82
    %p89 = scmp.eq.s32.totalorder %s16, 1
    %p90 = por %p88, %p89
    %p91 = scmp.ne.s32.totalorder %s82, %s83
    %p92 = scmp.eq.s32.totalorder %s16, 0
    %p93 = por %p91, %p92
    %p94 = scmp.ne.s32.totalorder %s82, %s83
    %p95 = scmp.eq.s32.totalorder %s17, 1
    %p96 = por %p94, %p95
    %p98 = scmp.ne.s32.totalorder %s83, %s97
    %p99 = scmp.eq.s32.totalorder %s17, 0
    %p100 = por %p98, %p99
    %s102 = sadd.s32 %s101, 1
    %p105 = scmp.eq.s32.totalorder %s11, 1
    %p106 = scmp.ne.s32.totalorder %s101, %s103
    %p107 = scmp.eq.s32.totalorder %s11, 0
    %p108 = por %p106, %p107
    %p109 = scmp.ne.s32.totalorder %s101, %s103
    %p110 = scmp.eq.s32.totalorder %s16, 1
    %p111 = por %p109, %p110
    %p112 = scmp.ne.s32.totalorder %s103, %s104
    %p113 = scmp.eq.s32.totalorder %s16, 0
    %p114 = por %p112, %p113
    %p115 = scmp.ne.s32.totalorder %s103, %s104
    %p116 = scmp.eq.s32.totalorder %s17, 1
    %p117 = por %p115, %p116
    %p119 = scmp.ne.s32.totalorder %s104, %s118
    %p120 = scmp.eq.s32.totalorder %s17, 0
    %p121 = por %p119, %p120
    %s123 = sadd.s32 %s122, 1
    %p126 = scmp.eq.s32.totalorder %s11, 1
    %p127 = scmp.ne.s32.totalorder %s122, %s124
    %p128 = scmp.eq.s32.totalorder %s11, 0
    %p129 = por %p127, %p128
    %p130 = scmp.ne.s32.totalorder %s122, %s124
    %p131 = scmp.eq.s32.totalorder %s16, 1
    %p132 = por %p130, %p131
    %p133 = scmp.ne.s32.totalorder %s124, %s125
    %p134 = scmp.eq.s32.totalorder %s16, 0
    %p135 = por %p133, %p134
    %p136 = scmp.ne.s32.totalorder %s124, %s125
    %p137 = scmp.eq.s32.totalorder %s17, 1
    %p138 = por %p136, %p137
    %p140 = scmp.ne.s32.totalorder %s125, %s139
    %p141 = scmp.eq.s32.totalorder %s17, 0
    %p142 = por %p140, %p141
    %s143 = ssub.s32 %s18, %s30
    %s144 = ssub.s32 %s19, %s26
    %s145 = sor.u32 %s143, %s144
    %p146 = scmp.eq.s32.totalorder %s145, 0
    %s148 = sadd.s32 %s147, 1
    %s149 = scalar_select %p146, %s147, %s148
    %p152 = pneg %p146
    %p153 = scmp.eq.s32.totalorder %s11, 1
    %p154 = por %p152, %p153
    %p155 = scmp.ne.s32.totalorder %s147, %s150
    %p156 = scmp.eq.s32.totalorder %s11, 0
    %p157 = por %p155, %p156
    %p158 = scmp.ne.s32.totalorder %s147, %s150
    %p159 = scmp.eq.s32.totalorder %s16, 1
    %p160 = por %p158, %p159
    %p161 = scmp.ne.s32.totalorder %s150, %s151
    %p162 = scmp.eq.s32.totalorder %s16, 0
    %p163 = por %p161, %p162
    %p164 = scmp.ne.s32.totalorder %s150, %s151
    %p165 = scmp.eq.s32.totalorder %s17, 1
    %p166 = por %p164, %p165
    %p168 = scmp.ne.s32.totalorder %s151, %s167
    %p169 = scmp.eq.s32.totalorder %s17, 0
    %p170 = por %p168, %p169
    %p171 = scmp.le.s32.totalorder 1, %s11
    %p172 = scmp.lt.s32.totalorder %s11, 3
    %p173 = pnand %p171, %p172
    %p174 = pneg %p173
    // Predicated region
    $region9: #{tpu_custom_call.1} parent=5 // pred_check
      _
    $region10: #{tpu_custom_call.1} parent=5 // pred_check_branch
      %176 = sbr.rel (%p173) target = $region12
    $region11: #{tpu_custom_call.1} parent=5 // pred_region
      %s177 = ssub.s32 %s11, 1
      // Predicated region
      $region13: #{tpu_custom_call.1} parent=11 // pred_check
        %p178 = pneg %p72
      $region14: #{tpu_custom_call.1} parent=11 // pred_check_branch
        %180 = sbr.rel (%p178) target = $region16
      $region15: #{tpu_custom_call.1} parent=11 // pred_region
        _
      $region16: #{tpu_custom_call.1} parent=11 // pred_fallthru
        _
      // Predicated region
      $region17: #{tpu_custom_call.1} parent=11 // pred_check
        %p181 = pneg %p93
      $region18: #{tpu_custom_call.1} parent=11 // pred_check_branch
        %183 = sbr.rel (%p181) target = $region20
      $region19: #{tpu_custom_call.1} parent=11 // pred_region
        _
      $region20: #{tpu_custom_call.1} parent=11 // pred_fallthru
        _
      // Predicated region
      $region21: #{tpu_custom_call.1} parent=11 // pred_check
        %p184 = pneg %p114
      $region22: #{tpu_custom_call.1} parent=11 // pred_check_branch
        %186 = sbr.rel (%p184) target = $region24
      $region23: #{tpu_custom_call.1} parent=11 // pred_region
        _
      $region24: #{tpu_custom_call.1} parent=11 // pred_fallthru
        _
      // Predicated region
      $region25: #{tpu_custom_call.1} parent=11 // pred_check
        %p187 = pneg %p135
      $region26: #{tpu_custom_call.1} parent=11 // pred_check_branch
        %189 = sbr.rel (%p187) target = $region28
      $region27: #{tpu_custom_call.1} parent=11 // pred_region
        _
      $region28: #{tpu_custom_call.1} parent=11 // pred_fallthru
        _
    $region12: #{tpu_custom_call.1} parent=5 // pred_fallthru
      _
    %p190 = scmp.lt.s32.totalorder %s11, 2
    // Predicated region
    $region29: #{tpu_custom_call.1} parent=5 // pred_check
      %p191 = pneg %p190
    $region30: #{tpu_custom_call.1} parent=5 // pred_check_branch
      %193 = sbr.rel (%p191) target = $region32
    $region31: #{tpu_custom_call.1} parent=5 // pred_region
      // Predicated region
      $region33: #{tpu_custom_call.1} parent=31 // pred_check
        %p194 = pneg %p45
      $region34: #{tpu_custom_call.1} parent=31 // pred_check_branch
        %196 = sbr.rel (%p194) target = $region36
      $region35: #{tpu_custom_call.1} parent=31 // pred_region
        %s197 = smul.u32 2, %s19
        %p198 = scmp.lt.s32.totalorder %s18, 1
        %s199 = scalar_select %p198, %s18, 1
        %p200 = scmp.lt.s32.totalorder %s197, 1
        %s201 = scalar_select %p200, %s197, 1
        %s202 = smul.addr %s199, 16
        %s203 = sadd.s32 %s201, %s202
        %s204 = smul.addr %s203, 8
        %s205 = scalar_lea.vmem %s0, %s204
        %s206 = smul.u32 2, %s19
      $region36: #{tpu_custom_call.1} parent=31 // pred_fallthru
        _
    $region32: #{tpu_custom_call.1} parent=5 // pred_fallthru
      _
    %p207 = scmp.le.s32.totalorder 1, %s11
    %p208 = scmp.lt.s32.totalorder %s11, 3
    %p209 = pnand %p207, %p208
    %p210 = pneg %p209
    // Predicated region
    $region37: #{tpu_custom_call.1} parent=5 // pred_check
      _
    $region38: #{tpu_custom_call.1} parent=5 // pred_check_branch
      %212 = sbr.rel (%p209) target = $region40
    $region39: #{tpu_custom_call.1} parent=5 // pred_region
      %s213 = ssub.s32 %s11, 1
      %s214 = smul.u32 2, %s21
      %p215 = scmp.lt.s32.totalorder %s20, 1
      %s216 = scalar_select %p215, %s20, 1
      %p217 = scmp.lt.s32.totalorder %s214, 1
      %s218 = scalar_select %p217, %s214, 1
      %s219 = smul.addr %s216, 16
      %s220 = sadd.s32 %s218, %s219
      %s221 = smul.addr %s220, 8
      %s222 = scalar_lea.vmem %s0, %s221
      %p223 = pneg %p51
      %p224 = pneg %p48
      %p225 = pneg %p72
      %p226 = pneg %p69
      %p227 = pneg %p93
      %p228 = pneg %p90
      %p229 = pneg %p114
      %p230 = pneg %p111
      %p231 = pneg %p135
      %p232 = pneg %p132
      %p233 = pneg %p163
      %p234 = pneg %p160
      %s235 = smul.u32 2, %s21
      %p236 = scmp.lt.s32.totalorder %s20, 1
      %s237 = scalar_select %p236, %s20, 1
      %p238 = scmp.lt.s32.totalorder %s235, 1
      %s239 = scalar_select %p238, %s235, 1
      %s240 = smul.addr %s237, 16
      %s241 = sadd.s32 %s239, %s240
      %s242 = smul.addr %s241, 8
      %s243 = scalar_lea.vmem %s5, %s242
      %s244 = smul.u32 2, %s21
      %p245 = scmp.lt.s32.totalorder %s20, 1
      %s246 = scalar_select %p245, %s20, 1
      %p247 = scmp.lt.s32.totalorder %s244, 1
      %s248 = scalar_select %p247, %s244, 1
      %s249 = smul.addr %s246, 16
      %s250 = sadd.s32 %s248, %s249
      %s251 = smul.addr %s250, 8
      %s252 = scalar_lea.vmem %s0, %s251
      %s253 = smul.u32 2, %s21
      %s254 = smul.u32 2, %s21
      %p255 = scmp.lt.s32.totalorder %s20, 1
      %s256 = scalar_select %p255, %s20, 1
      %p257 = scmp.lt.s32.totalorder %s254, 1
      %s258 = scalar_select %p257, %s254, 1
      %s259 = smul.addr %s256, 16
      %s260 = sadd.s32 %s258, %s259
      %s261 = smul.addr %s260, 8
      %s262 = scalar_lea.vmem %s5, %s261
      %s263 = smul.u32 2, %s21
      %v264 = vld [vmem:[%s252] sm:$0xff]
      %v265 = vld [vmem:[%s252 + $0x8] sm:$0xff]
      %v266 = vld [vmem:[%s252 + $0x10] sm:$0xff]
      %v267 = vld [vmem:[%s252 + $0x18] sm:$0xff]
      %v268 = vld [vmem:[%s252 + $0x20] sm:$0xff]
      %v269 = vld [vmem:[%s252 + $0x28] sm:$0xff]
      %v270 = vld [vmem:[%s252 + $0x30] sm:$0xff]
      %v271 = vld [vmem:[%s252 + $0x38] sm:$0xff]
      %v272 = vld [vmem:[%s252 + $0x40] sm:$0xff]
      %v273 = vld [vmem:[%s252 + $0x48] sm:$0xff]
      %v274 = vld [vmem:[%s252 + $0x50] sm:$0xff]
      %v275 = vld [vmem:[%s252 + $0x58] sm:$0xff]
      %v276 = vld [vmem:[%s252 + $0x60] sm:$0xff]
      %v277 = vld [vmem:[%s252 + $0x68] sm:$0xff]
      %v278 = vld [vmem:[%s252 + $0x70] sm:$0xf]
      %v279 = vld [vmem:[%s252 + $0x78] sm:$0xf]
      %v280 = vld [vmem:[%s1] sm:$0x7]
      %v281 = vld [vmem:[%s2] sm:$0x7]
      %283 = vset.pattern.permute.xlu0 0
      %284 = vperm.xlu0 %283, %v281
      %v285 = vpop.permute.xlu0 %284
      %vm287 = vcmask 490496
      %v289 = vsel %vm287, %v280, 0
      %vm291 = vcmask 1043456
      %v293 = vsel %vm291, %v278, 0
      %v296 = vsel %vm291, %v279, 0
      %298 = vmatprep.subr.mxu0 0.0
      %299 = vmatpush1.msra.mxu0 0.0
      %300 = vmatprep.subr.mxu0 0.0
      %301 = vmatpush1.msra.mxu0 0.0
      %302 = vmatprep.subr.mxu0 0.0
      %303 = vmatpush1.msra.mxu0 0.0
      %304 = vmatprep.subr.mxu0 0.0
      %305 = vmatpush1.msra.mxu0 0.0
      %306 = vmatprep.subr.mxu0 0.0
      %307 = vmatpush1.msra.mxu0 0.0
      %308 = vmatprep.subr.mxu0 0.0
      %309 = vmatpush1.msra.mxu0 0.0
      %310 = vmatprep.subr.mxu0 0.0
      %311 = vmatpush1.msra.mxu0 0.0
      %312 = vmatprep.subr.mxu0 0.0
      %313 = vmatpush1.msra.mxu0 0.0
      %314 = vmatprep.subr.mxu0 %v296
      %315 = vmatpush1.msra.mxu0 %v293
      %316 = vmatprep.subr.mxu0 %v277
      %317 = vmatpush1.msra.mxu0 %v276
      %318 = vmatprep.subr.mxu0 %v275
      %319 = vmatpush1.msra.mxu0 %v274
      %320 = vmatprep.subr.mxu0 %v273
      %321 = vmatpush1.msra.mxu0 %v272
      %322 = vmatprep.subr.mxu0 %v271
      %323 = vmatpush1.msra.mxu0 %v270
      %324 = vmatprep.subr.mxu0 %v269
      %325 = vmatpush1.msra.mxu0 %v268
      %326 = vmatprep.subr.mxu0 %v267
      %327 = vmatpush1.msra.mxu0 %v266
      %328 = vmatprep.subr.mxu0 %v265
      %329 = vmatpush1.msra.mxu0 %v264
      %330 = vmatprep.subr.mxu0 0.0
      %331 = vmatpush2.msra.mxu0 0.0
      %332 = vmatprep.subr.mxu0 0.0
      %333 = vmatpush2.msra.mxu0 0.0
      %334 = vmatprep.subr.mxu0 0.0
      %335 = vmatpush2.msra.mxu0 0.0
      %336 = vmatprep.subr.mxu0 0.0
      %337 = vmatpush2.msra.mxu0 0.0
      %338 = vmatprep.subr.mxu0 0.0
      %339 = vmatpush2.msra.mxu0 0.0
      %340 = vmatprep.subr.mxu0 0.0
      %341 = vmatpush2.msra.mxu0 0.0
      %342 = vmatprep.subr.mxu0 0.0
      %343 = vmatpush2.msra.mxu0 0.0
      %344 = vmatprep.subr.mxu0 0.0
      %345 = vmatpush2.msra.mxu0 0.0
      %346 = vmatprep.subr.mxu0 0.0
      %347 = vmatpush2.msra.mxu0 0.0
      %348 = vmatprep.subr.mxu0 0.0
      %349 = vmatpush2.msra.mxu0 0.0
      %350 = vmatprep.subr.mxu0 0.0
      %351 = vmatpush2.msra.mxu0 0.0
      %352 = vmatprep.subr.mxu0 0.0
      %353 = vmatpush2.msra.mxu0 0.0
      %354 = vmatprep.subr.mxu0 0.0
      %355 = vmatpush2.msra.mxu0 0.0
      %356 = vmatprep.subr.mxu0 0.0
      %357 = vmatpush2.msra.mxu0 0.0
      %358 = vmatprep.subr.mxu0 0.0
      %359 = vmatpush2.msra.mxu0 0.0
      %360 = vmatprep.subr.mxu0 0.0
      %361 = vmatpush2.msra.mxu0 0.0
      %362 = vmatprep.mubr.f32.mxu0 0.0
      %363 = vmatmul.mubr.f32.gmra.mxu0 %v289
      %v364 = vpop.f32.mrf.mxu0
      %v365 = vadd.f32 %v285, %v364
      %v366 = vpop.f32.mrf.mxu0
      %v367 = vadd.f32 %v285, %v366
      %368 = vdwg.mxu0
      %v369 = vmax.f32 %v365, 0.0
      %v370 = vmax.f32 %v367, 0.0
      %v371 = vld [vmem:[%s3] sm:$0xff]
      %v372 = vld [vmem:[%s3 + $0x8] sm:$0xff]
      %v373 = vld [vmem:[%s3 + $0x10] sm:$0xff]
      %v374 = vld [vmem:[%s3 + $0x18] sm:$0xff]
      %v375 = vld [vmem:[%s3 + $0x20] sm:$0xff]
      %v376 = vld [vmem:[%s3 + $0x28] sm:$0xff]
      %v377 = vld [vmem:[%s3 + $0x30] sm:$0xff]
      %v378 = vld [vmem:[%s3 + $0x38] sm:$0xf]
      %v379 = vld [vmem:[%s4] sm:$0xff]
      %v380 = vld [vmem:[%s4 + $0x8] sm:$0xff]
      %v381 = vld [vmem:[%s4 + $0x10] sm:$0xff]
      %v382 = vld [vmem:[%s4 + $0x18] sm:$0xff]
      %v383 = vld [vmem:[%s4 + $0x20] sm:$0xff]
      %v384 = vld [vmem:[%s4 + $0x28] sm:$0xff]
      %v385 = vld [vmem:[%s4 + $0x30] sm:$0xff]
      %v386 = vld [vmem:[%s4 + $0x38] sm:$0xf]
      %388 = vset.pattern.permute.xlu0 0
      %389 = vperm.xlu0 %388, %v379
      %v390 = vpop.permute.xlu0 %389
      %393 = vset.pattern.permute.xlu0 0
      %394 = vperm.xlu0 %393, %v380
      %v395 = vpop.permute.xlu0 %394
      %398 = vset.pattern.permute.xlu0 0
      %399 = vperm.xlu0 %398, %v381
      %v400 = vpop.permute.xlu0 %399
      %403 = vset.pattern.permute.xlu0 0
      %404 = vperm.xlu0 %403, %v382
      %v405 = vpop.permute.xlu0 %404
      %408 = vset.pattern.permute.xlu0 0
      %409 = vperm.xlu0 %408, %v383
      %v410 = vpop.permute.xlu0 %409
      %413 = vset.pattern.permute.xlu0 0
      %414 = vperm.xlu0 %413, %v384
      %v415 = vpop.permute.xlu0 %414
      %418 = vset.pattern.permute.xlu0 0
      %419 = vperm.xlu0 %418, %v385
      %v420 = vpop.permute.xlu0 %419
      %423 = vset.pattern.permute.xlu0 0
      %424 = vperm.xlu0 %423, %v386
      %v425 = vpop.permute.xlu0 %424
      %vm427 = vcmask 23552
      %v429 = vsel %vm427, %v371, 0
      %v432 = vsel %vm427, %v372, 0
      %v435 = vsel %vm427, %v373, 0
      %v438 = vsel %vm427, %v374, 0
      %v441 = vsel %vm427, %v375, 0
      %v444 = vsel %vm427, %v376, 0
      %v447 = vsel %vm427, %v377, 0
      %v450 = vsel %vm427, %v378, 0
      %vm452 = vcmask 1042432
      %v454 = vsel %vm452, %v369, 0
      %v457 = vsel %vm452, %v370, 0
      %459 = vmatprep.subr.mxu0 0.0
      %460 = vmatpush1.msra.mxu0 0.0
      %461 = vmatprep.subr.mxu0 0.0
      %462 = vmatpush1.msra.mxu0 0.0
      %463 = vmatprep.subr.mxu0 0.0
      %464 = vmatpush1.msra.mxu0 0.0
      %465 = vmatprep.subr.mxu0 0.0
      %466 = vmatpush1.msra.mxu0 0.0
      %467 = vmatprep.subr.mxu0 0.0
      %468 = vmatpush1.msra.mxu0 0.0
      %469 = vmatprep.subr.mxu0 0.0
      %470 = vmatpush1.msra.mxu0 0.0
      %471 = vmatprep.subr.mxu0 0.0
      %472 = vmatpush1.msra.mxu0 0.0
      %473 = vmatprep.subr.mxu0 0.0
      %474 = vmatpush1.msra.mxu0 0.0
      %475 = vmatprep.subr.mxu0 0.0
      %476 = vmatpush1.msra.mxu0 0.0
      %477 = vmatprep.subr.mxu0 0.0
      %478 = vmatpush1.msra.mxu0 0.0
      %479 = vmatprep.subr.mxu0 0.0
      %480 = vmatpush1.msra.mxu0 0.0
      %481 = vmatprep.subr.mxu0 0.0
      %482 = vmatpush1.msra.mxu0 0.0
      %483 = vmatprep.subr.mxu0 0.0
      %484 = vmatpush1.msra.mxu0 0.0
      %485 = vmatprep.subr.mxu0 0.0
      %486 = vmatpush1.msra.mxu0 0.0
      %487 = vmatprep.subr.mxu0 0.0
      %488 = vmatpush1.msra.mxu0 0.0
      %489 = vmatprep.subr.mxu0 %v457
      %490 = vmatpush1.msra.mxu0 %v454
      %491 = vmatprep.subr.mxu0 0.0
      %492 = vmatpush2.msra.mxu0 0.0
      %493 = vmatprep.subr.mxu0 0.0
      %494 = vmatpush2.msra.mxu0 0.0
      %495 = vmatprep.subr.mxu0 0.0
      %496 = vmatpush2.msra.mxu0 0.0
      %497 = vmatprep.subr.mxu0 0.0
      %498 = vmatpush2.msra.mxu0 0.0
      %499 = vmatprep.subr.mxu0 0.0
      %500 = vmatpush2.msra.mxu0 0.0
      %501 = vmatprep.subr.mxu0 0.0
      %502 = vmatpush2.msra.mxu0 0.0
      %503 = vmatprep.subr.mxu0 0.0
      %504 = vmatpush2.msra.mxu0 0.0
      %505 = vmatprep.subr.mxu0 0.0
      %506 = vmatpush2.msra.mxu0 0.0
      %507 = vmatprep.subr.mxu0 0.0
      %508 = vmatpush2.msra.mxu0 0.0
      %509 = vmatprep.subr.mxu0 0.0
      %510 = vmatpush2.msra.mxu0 0.0
      %511 = vmatprep.subr.mxu0 0.0
      %512 = vmatpush2.msra.mxu0 0.0
      %513 = vmatprep.subr.mxu0 0.0
      %514 = vmatpush2.msra.mxu0 0.0
      %515 = vmatprep.subr.mxu0 0.0
      %516 = vmatpush2.msra.mxu0 0.0
      %517 = vmatprep.subr.mxu0 0.0
      %518 = vmatpush2.msra.mxu0 0.0
      %519 = vmatprep.subr.mxu0 0.0
      %520 = vmatpush2.msra.mxu0 0.0
      %521 = vmatprep.subr.mxu0 0.0
      %522 = vmatpush2.msra.mxu0 0.0
      %523 = vmatprep.mubr.f32.mxu0 0.0
      %524 = vmatmul.mubr.f32.gmra.mxu0 %v429
      %v525 = vpop.f32.mrf.mxu0
      %v526 = vadd.f32 %v390, %v525
      %v527 = vpop.f32.mrf.mxu0
      %v528 = vadd.f32 %v390, %v527
      %529 = vmatprep.mubr.f32.mxu0 0.0
      %530 = vmatmul.mubr.f32.gmra.mxu0 %v432
      %v531 = vpop.f32.mrf.mxu0
      %v532 = vadd.f32 %v395, %v531
      %v533 = vpop.f32.mrf.mxu0
      %v534 = vadd.f32 %v395, %v533
      %535 = vmatprep.mubr.f32.mxu0 0.0
      %536 = vmatmul.mubr.f32.gmra.mxu0 %v435
      %v537 = vpop.f32.mrf.mxu0
      %v538 = vadd.f32 %v400, %v537
      %v539 = vpop.f32.mrf.mxu0
      %v540 = vadd.f32 %v400, %v539
      %541 = vmatprep.mubr.f32.mxu0 0.0
      %542 = vmatmul.mubr.f32.gmra.mxu0 %v438
      %v543 = vpop.f32.mrf.mxu0
      %v544 = vadd.f32 %v405, %v543
      %v545 = vpop.f32.mrf.mxu0
      %v546 = vadd.f32 %v405, %v545
      %547 = vmatprep.mubr.f32.mxu0 0.0
      %548 = vmatmul.mubr.f32.gmra.mxu0 %v441
      %v549 = vpop.f32.mrf.mxu0
      %v550 = vadd.f32 %v410, %v549
      %v551 = vpop.f32.mrf.mxu0
      %v552 = vadd.f32 %v410, %v551
      %553 = vmatprep.mubr.f32.mxu0 0.0
      %554 = vmatmul.mubr.f32.gmra.mxu0 %v444
      %v555 = vpop.f32.mrf.mxu0
      %v556 = vadd.f32 %v415, %v555
      %v557 = vpop.f32.mrf.mxu0
      %v558 = vadd.f32 %v415, %v557
      %559 = vmatprep.mubr.f32.mxu0 0.0
      %560 = vmatmul.mubr.f32.gmra.mxu0 %v447
      %v561 = vpop.f32.mrf.mxu0
      %v562 = vadd.f32 %v420, %v561
      %v563 = vpop.f32.mrf.mxu0
      %v564 = vadd.f32 %v420, %v563
      %565 = vmatprep.mubr.f32.mxu0 0.0
      %566 = vmatmul.mubr.f32.gmra.mxu0 %v450
      %v567 = vpop.f32.mrf.mxu0
      %v568 = vadd.f32 %v425, %v567
      %v569 = vpop.f32.mrf.mxu0
      %v570 = vadd.f32 %v425, %v569
      %571 = vdwg.mxu0
      %v572 = vxor.u32 %v526, 2147483648
      %v573 = vxor.u32 %v528, 2147483648
      %v574 = vxor.u32 %v532, 2147483648
      %v575 = vxor.u32 %v534, 2147483648
      %v576 = vxor.u32 %v538, 2147483648
      %v577 = vxor.u32 %v540, 2147483648
      %v578 = vxor.u32 %v544, 2147483648
      %v579 = vxor.u32 %v546, 2147483648
      %v580 = vxor.u32 %v550, 2147483648
      %v581 = vxor.u32 %v552, 2147483648
      %v582 = vxor.u32 %v556, 2147483648
      %v583 = vxor.u32 %v558, 2147483648
      %v584 = vxor.u32 %v562, 2147483648
      %v585 = vxor.u32 %v564, 2147483648
      %v586 = vxor.u32 %v568, 2147483648
      %v587 = vxor.u32 %v570, 2147483648
      %v588 = vmul.f32 %v572, 1.442695
      %v589 = vpow.pop %v588
      %v590 = vmul.f32 %v573, 1.442695
      %v591 = vpow.pop %v590
      %v592 = vmul.f32 %v574, 1.442695
      %v593 = vpow.pop %v592
      %v594 = vmul.f32 %v575, 1.442695
      %v595 = vpow.pop %v594
      %v596 = vmul.f32 %v576, 1.442695
      %v597 = vpow.pop %v596
      %v598 = vmul.f32 %v577, 1.442695
      %v599 = vpow.pop %v598
      %v600 = vmul.f32 %v578, 1.442695
      %v601 = vpow.pop %v600
      %v602 = vmul.f32 %v579, 1.442695
      %v603 = vpow.pop %v602
      %v604 = vmul.f32 %v580, 1.442695
      %v605 = vpow.pop %v604
      %v606 = vmul.f32 %v581, 1.442695
      %v607 = vpow.pop %v606
      %v608 = vmul.f32 %v582, 1.442695
      %v609 = vpow.pop %v608
      %v610 = vmul.f32 %v583, 1.442695
      %v611 = vpow.pop %v610
      %v612 = vmul.f32 %v584, 1.442695
      %v613 = vpow.pop %v612
      %v614 = vmul.f32 %v585, 1.442695
      %v615 = vpow.pop %v614
      %v616 = vmul.f32 %v586, 1.442695
      %v617 = vpow.pop %v616
      %v618 = vmul.f32 %v587, 1.442695
      %v619 = vpow.pop %v618
      %v620 = vadd.f32 %v589, 1.0
      %v621 = vadd.f32 %v591, 1.0
      %v622 = vadd.f32 %v593, 1.0
      %v623 = vadd.f32 %v595, 1.0
      %v624 = vadd.f32 %v597, 1.0
      %v625 = vadd.f32 %v599, 1.0
      %v626 = vadd.f32 %v601, 1.0
      %v627 = vadd.f32 %v603, 1.0
      %v628 = vadd.f32 %v605, 1.0
      %v629 = vadd.f32 %v607, 1.0
      %v630 = vadd.f32 %v609, 1.0
      %v631 = vadd.f32 %v611, 1.0
      %v632 = vadd.f32 %v613, 1.0
      %v633 = vadd.f32 %v615, 1.0
      %v634 = vadd.f32 %v617, 1.0
      %v635 = vadd.f32 %v619, 1.0
      %v636 = vrcp.pop %v620
      %v637 = vmul.f32 1.0, %v636
      %v638 = vrcp.pop %v621
      %v639 = vmul.f32 1.0, %v638
      %v640 = vrcp.pop %v622
      %v641 = vmul.f32 1.0, %v640
      %v642 = vrcp.pop %v623
      %v643 = vmul.f32 1.0, %v642
      %v644 = vrcp.pop %v624
      %v645 = vmul.f32 1.0, %v644
      %v646 = vrcp.pop %v625
      %v647 = vmul.f32 1.0, %v646
      %v648 = vrcp.pop %v626
      %v649 = vmul.f32 1.0, %v648
      %v650 = vrcp.pop %v627
      %v651 = vmul.f32 1.0, %v650
      %v652 = vrcp.pop %v628
      %v653 = vmul.f32 1.0, %v652
      %v654 = vrcp.pop %v629
      %v655 = vmul.f32 1.0, %v654
      %v656 = vrcp.pop %v630
      %v657 = vmul.f32 1.0, %v656
      %v658 = vrcp.pop %v631
      %v659 = vmul.f32 1.0, %v658
      %v660 = vrcp.pop %v632
      %v661 = vmul.f32 1.0, %v660
      %v662 = vrcp.pop %v633
      %v663 = vmul.f32 1.0, %v662
      %v664 = vrcp.pop %v634
      %v665 = vmul.f32 1.0, %v664
      %v666 = vrcp.pop %v635
      %v667 = vmul.f32 1.0, %v666
      %v668 = vmul.f32 %v637, %v264
      %v669 = vmul.f32 %v639, %v265
      %v670 = vmul.f32 %v641, %v266
      %v671 = vmul.f32 %v643, %v267
      %v672 = vmul.f32 %v645, %v268
      %v673 = vmul.f32 %v647, %v269
      %v674 = vmul.f32 %v649, %v270
      %v675 = vmul.f32 %v651, %v271
      %v676 = vmul.f32 %v653, %v272
      %v677 = vmul.f32 %v655, %v273
      %v678 = vmul.f32 %v657, %v274
      %v679 = vmul.f32 %v659, %v275
      %v680 = vmul.f32 %v661, %v276
      %v681 = vmul.f32 %v663, %v277
      %v682 = vmul.f32 %v665, %v278
      %v683 = vmul.f32 %v667, %v279
      %684 = vst [vmem:[%s262] sm:$0xff] %v668
      %685 = vst [vmem:[%s262 + $0x8] sm:$0xff] %v669
      %686 = vst [vmem:[%s262 + $0x10] sm:$0xff] %v670
      %687 = vst [vmem:[%s262 + $0x18] sm:$0xff] %v671
      %688 = vst [vmem:[%s262 + $0x20] sm:$0xff] %v672
      %689 = vst [vmem:[%s262 + $0x28] sm:$0xff] %v673
      %690 = vst [vmem:[%s262 + $0x30] sm:$0xff] %v674
      %691 = vst [vmem:[%s262 + $0x38] sm:$0xff] %v675
      %692 = vst [vmem:[%s262 + $0x40] sm:$0xff] %v676
      %693 = vst [vmem:[%s262 + $0x48] sm:$0xff] %v677
      %694 = vst [vmem:[%s262 + $0x50] sm:$0xff] %v678
      %695 = vst [vmem:[%s262 + $0x58] sm:$0xff] %v679
      %696 = vst [vmem:[%s262 + $0x60] sm:$0xff] %v680
      %697 = vst [vmem:[%s262 + $0x68] sm:$0xff] %v681
      %698 = vst [vmem:[%s262 + $0x70] sm:$0xf] %v682
      %699 = vst [vmem:[%s262 + $0x78] sm:$0xf] %v683
      %s700 = smul.u32 2, %s21
      %p701 = scmp.lt.s32.totalorder %s20, 1
      %s702 = scalar_select %p701, %s20, 1
      %p703 = scmp.lt.s32.totalorder %s700, 1
      %s704 = scalar_select %p703, %s700, 1
      %s705 = smul.addr %s702, 16
      %s706 = sadd.s32 %s704, %s705
      %s707 = smul.addr %s706, 8
      %s708 = scalar_lea.vmem %s5, %s707
      // Predicated region
      $region41: #{tpu_custom_call.1} parent=39 // pred_check
        %p709 = pneg %p160
      $region42: #{tpu_custom_call.1} parent=39 // pred_check_branch
        %711 = sbr.rel (%p709) target = $region44
      $region43: #{tpu_custom_call.1} parent=39 // pred_region
        %s712 = smul.u32 2, %s21
      $region44: #{tpu_custom_call.1} parent=39 // pred_fallthru
        _
    $region40: #{tpu_custom_call.1} parent=5 // pred_fallthru
      _
    %p713 = scmp.le.s32.totalorder 2, %s11
    // Predicated region
    $region45: #{tpu_custom_call.1} parent=5 // pred_check
      %p714 = pneg %p713
    $region46: #{tpu_custom_call.1} parent=5 // pred_check_branch
      %716 = sbr.rel (%p714) target = $region48
    $region47: #{tpu_custom_call.1} parent=5 // pred_region
      %s717 = ssub.s32 %s11, 2
      // Predicated region
      $region49: #{tpu_custom_call.1} parent=47 // pred_check
        %p718 = pneg %p166
      $region50: #{tpu_custom_call.1} parent=47 // pred_check_branch
        %720 = sbr.rel (%p718) target = $region52
      $region51: #{tpu_custom_call.1} parent=47 // pred_region
        %s721 = smul.u32 2, %s23
        %p722 = scmp.lt.s32.totalorder %s22, 1
        %s723 = scalar_select %p722, %s22, 1
        %p724 = scmp.lt.s32.totalorder %s721, 1
        %s725 = scalar_select %p724, %s721, 1
        %s726 = smul.addr %s723, 16
        %s727 = sadd.s32 %s725, %s726
        %s728 = smul.addr %s727, 8
        %s729 = scalar_lea.vmem %s5, %s728
      $region52: #{tpu_custom_call.1} parent=47 // pred_fallthru
        _
    $region48: #{tpu_custom_call.1} parent=5 // pred_fallthru
      _
  $region6: #{tpu_custom_call.1} parent=0 // loop_footer
    %s15 = sadd.s32 1, %s11
  $region7: #{tpu_custom_call.1} parent=0 // loop_footer_branch
    %10 = sbr.rel target = $region3
  $region8: #{tpu_custom_call.1} parent=0 // loop_exit
    _

</llo_original>
